<compile_context>
chip_gen: v7x
topology: tpu7x:2x2x1
jax: 0.10.0
libtpu: 0.0.40
codegen_flags: <defaults>
</compile_context>

<pallas_src>
import functools

import jax
import jax.numpy as jnp
from jax.experimental import pallas as pl
from jax.experimental.pallas import tpu as pltpu


_TARGET_BLOCK_BYTES = 4 << 20  # ~4 MiB streaming tiles


def _round_up(v, m):
    return (v + m - 1) // m * m


def _vmem_limit_bytes(default_phys=64 << 20):
    """~3/4 of physical VMEM: 96 MiB on v5e/v6e (128 MiB phys), 48 MiB on v7x (64 MiB phys)."""
    phys = default_phys
    try:
        info = pltpu.get_tpu_info()
        phys = int(getattr(info, "vmem_capacity_bytes", default_phys)) or default_phys
    except Exception:
        pass
    return int(min(phys * 3 // 4, 100 << 20))


def _choose_tiles(R, L, target_bytes=_TARGET_BLOCK_BYTES, itemsize=4):
    """Pick (r_tile, l_tile) for a (R, L) streaming view.

    l_tile is a multiple of 128 (lane axis) unless L <= 128 (full extent);
    r_tile is a multiple of 8 (sublane axis) unless the full extent R is used.
    Non-divisible extents are handled with cdiv grids + lane masking (pass 1)
    and discarded padded writes (pass 2).
    """
    if L <= 128:
        l_tile = L  # full extent is always legal
    else:
        max_l = max(128, (target_bytes // (8 * itemsize)) // 128 * 128)
        l_tile = min(_round_up(L, 128), max_l)
    max_r = max(8, (target_bytes // (l_tile * itemsize)) // 8 * 8)
    r_tile = R if R <= max_r else max_r
    return r_tile, l_tile


def _bn_stats_kernel(x_ref, sum_ref, sumsq_ref, *, L, l_tile, mask_lanes):
    """Pass 1: per-row partial sums.  x_ref: (r_tile, l_tile) tile of x viewed as (N*C, H*W).

    Output blocks (r_tile, 1) are resident across the lane-tile ("arbitrary") axis;
    padded rows of the last row block land in discarded write padding, so no row mask
    is needed.  Lanes past L are masked to zero before accumulation.
    """
    l = pl.program_id(1)
    x = x_ref[...].astype(jnp.float32)  # (r_tile, l_tile)

    if mask_lanes:  # static flag: only emitted when L % l_tile != 0
        lane = jax.lax.broadcasted_iota(jnp.int32, (1, l_tile), 1)
        x = jnp.where(lane + l * l_tile < L, x, 0.0)

    psum = jnp.sum(x, axis=1, keepdims=True)      # (r_tile, 1)
    psq = jnp.sum(x * x, axis=1, keepdims=True)   # (r_tile, 1)

    @pl.when(l == 0)
    def _():
        sum_ref[...] = psum
        sumsq_ref[...] = psq

    @pl.when(l > 0)
    def _():
        sum_ref[...] += psum
        sumsq_ref[...] += psq


def _bn_apply_kernel(x_ref, scale_ref, shift_ref, o_ref):
    """Pass 2: y = x * scale + shift (per-row folded affine, 2 VALU ops per element)."""
    x = x_ref[...].astype(jnp.float32)                 # (r_tile, l_tile)
    o_ref[...] = (x * scale_ref[...] + shift_ref[...]).astype(o_ref.dtype)


def batchnorm_forward(x_nchw, gamma, beta, eps=1e-5):
    """x_nchw: (N, C, H, W). gamma, beta: (C,). Returns (N, C, H, W)."""
    N, C, H, W = x_nchw.shape
    L = H * W
    R = N * C
    x2 = x_nchw.reshape(R, L)  # free reshape (adjacent row-major dims), no HBM traffic

    r_tile, l_tile = _choose_tiles(R, L)
    num_r = pl.cdiv(R, r_tile)
    num_l = pl.cdiv(L, l_tile)
    mask_lanes = (L % l_tile) != 0
    vmem_limit = _vmem_limit_bytes()
    xbytes = int(jnp.dtype(x_nchw.dtype).itemsize)

    # ---- Pass 1: per-row (n, c) partial sums / sums of squares ------------------
    stats_kernel = functools.partial(
        _bn_stats_kernel, L=L, l_tile=l_tile, mask_lanes=mask_lanes)
    sums, sumsq = pl.pallas_call(
        stats_kernel,
        out_shape=(jax.ShapeDtypeStruct((R, 1), jnp.float32),
                   jax.ShapeDtypeStruct((R, 1), jnp.float32)),
        grid=(num_r, num_l),
        in_specs=[pl.BlockSpec((r_tile, l_tile), lambda r, l: (r, l))],
        out_specs=(pl.BlockSpec((r_tile, 1), lambda r, l: (r, 0)),
                   pl.BlockSpec((r_tile, 1), lambda r, l: (r, 0))),
        compiler_params=pltpu.CompilerParams(
            dimension_semantics=("parallel", "arbitrary"),
            vmem_limit_bytes=vmem_limit),
        cost_estimate=pl.CostEstimate(
            flops=int(3 * N * C * L),
            transcendentals=0,
            bytes_accessed=int(N * C * L * xbytes + 2 * R * 4)),
    )(x2)

    # ---- Tiny per-channel fold in plain JAX (O(N*C) work, negligible) -----------
    inv_m = 1.0 / float(N * L)
    mean = jnp.sum(sums.reshape(N, C), axis=0) * inv_m           # (C,)
    ex2 = jnp.sum(sumsq.reshape(N, C), axis=0) * inv_m           # (C,)
    var = jnp.maximum(ex2 - mean * mean, 0.0)                    # biased variance
    scale = gamma.astype(jnp.float32) * jax.lax.rsqrt(var + eps)  # (C,)
    shift = beta.astype(jnp.float32) - mean * scale               # (C,)
    scale_r = jnp.broadcast_to(scale[None, :], (N, C)).reshape(R, 1)
    shift_r = jnp.broadcast_to(shift[None, :], (N, C)).reshape(R, 1)

    # ---- Pass 2: normalize (fully parallel, lane-dense stores) ------------------
    y2 = pl.pallas_call(
        _bn_apply_kernel,
        out_shape=jax.ShapeDtypeStruct((R, L), x_nchw.dtype),
        grid=(num_r, num_l),
        in_specs=[pl.BlockSpec((r_tile, l_tile), lambda r, l: (r, l)),
                  pl.BlockSpec((r_tile, 1), lambda r, l: (r, 0)),
                  pl.BlockSpec((r_tile, 1), lambda r, l: (r, 0))],
        out_specs=pl.BlockSpec((r_tile, l_tile), lambda r, l: (r, l)),
        compiler_params=pltpu.CompilerParams(
            dimension_semantics=("parallel", "parallel"),
            vmem_limit_bytes=vmem_limit),
        cost_estimate=pl.CostEstimate(
            flops=int(2 * N * C * L),
            transcendentals=0,
            bytes_accessed=int(2 * N * C * L * xbytes + 2 * R * 4)),
    )(x2, scale_r, shift_r)

    return y2.reshape(N, C, H, W)


if __name__ == "__main__":
    key = jax.random.PRNGKey(0)
    kx, kg, kb = jax.random.split(key, 3)
    N, C, H, W = 2, 4, 16, 16
    x = jax.random.normal(kx, (N, C, H, W), dtype=jnp.float32) * 2.0 + 0.5

    # Parameters per _NormBase.reset_parameters() are ones/zeros; perturb them
    # deterministically so the affine fold is actually exercised.
    gamma = 1.0 + 0.1 * jax.random.normal(kg, (C,), dtype=jnp.float32)
    beta = 0.1 * jax.random.normal(kb, (C,), dtype=jnp.float32)

    y = batchnorm_forward(x, gamma, beta, eps=1e-5)
    y = jax.block_until_ready(y)

    # Reference: batch statistics, biased variance (track_running_stats=False).
    mean = jnp.mean(x, axis=(0, 2, 3), keepdims=True)
    var = jnp.mean((x - mean) ** 2, axis=(0, 2, 3), keepdims=True)
    ref = (x - mean) / jnp.sqrt(var + 1e-5) * gamma.reshape(1, C, 1, 1) \
        + beta.reshape(1, C, 1, 1)
    assert jnp.allclose(y, ref, atol=1e-4, rtol=1e-4), "mismatch vs reference"

    print("KERNEL_OK")
</pallas_src>

<mosaic_0001>
module attributes {stable_mosaic.version = 11 : i64} {
  func.func @_bn_stats_kernel(%arg0: i32, %arg1: i32, %arg2: memref<8x256xf32, #tpu.memory_space<vmem>>, %arg3: memref<8x1xf32, #tpu.memory_space<vmem>>, %arg4: memref<8x1xf32, #tpu.memory_space<vmem>>) attributes {dimension_semantics = [#tpu.dimension_semantics<parallel>, #tpu.dimension_semantics<arbitrary>], iteration_bounds = array<i64: 1, 1>, scalar_prefetch = 0 : i64, scratch_operands = 0 : i64, tpu.core_type = #tpu.core_type<tc>, window_params = [{transform_indices = @transform_0, window_bounds = array<i64: 8, 256>}, {transform_indices = @transform_1, window_bounds = array<i64: 8, 1>}, {transform_indices = @transform_2, window_bounds = array<i64: 8, 1>}]} {
    %c0 = arith.constant 0 : index
    %c0_0 = arith.constant 0 : index
    %0 = vector.load %arg2[%c0, %c0_0] : memref<8x256xf32, #tpu.memory_space<vmem>>, vector<8x256xf32>
    %cst = arith.constant dense<0.000000e+00> : vector<8xf32>
    %1 = vector.multi_reduction <add>, %0, %cst [1] : vector<8x256xf32> to vector<8xf32>
    %2 = vector.shape_cast %1 : vector<8xf32> to vector<8x1xf32>
    %3 = arith.mulf %0, %0 : vector<8x256xf32>
    %cst_1 = arith.constant dense<0.000000e+00> : vector<8xf32>
    %4 = vector.multi_reduction <add>, %3, %cst_1 [1] : vector<8x256xf32> to vector<8xf32>
    %5 = vector.shape_cast %4 : vector<8xf32> to vector<8x1xf32>
    %c0_i32 = arith.constant 0 : i32
    %6 = arith.cmpi eq, %arg1, %c0_i32 : i32
    %7 = arith.extui %6 : i1 to i32
    %c0_i32_2 = arith.constant 0 : i32
    %8 = arith.cmpi ne, %7, %c0_i32_2 : i32
    scf.if %8 {
      %c0_5 = arith.constant 0 : index
      %c0_6 = arith.constant 0 : index
      %12 = vector.load %arg3[%c0_5, %c0_6] : memref<8x1xf32, #tpu.memory_space<vmem>>, vector<8x1xf32>
      tpu.vector_store %arg3[%c0_5, %c0_6], %2 {strides = array<i32>} : memref<8x1xf32, #tpu.memory_space<vmem>>, vector<8x1xf32>,
      %c0_7 = arith.constant 0 : index
      %c0_8 = arith.constant 0 : index
      %13 = vector.load %arg4[%c0_7, %c0_8] : memref<8x1xf32, #tpu.memory_space<vmem>>, vector<8x1xf32>
      tpu.vector_store %arg4[%c0_7, %c0_8], %5 {strides = array<i32>} : memref<8x1xf32, #tpu.memory_space<vmem>>, vector<8x1xf32>,
    } else {
    }
    %c0_i32_3 = arith.constant 0 : i32
    %9 = arith.cmpi sgt, %arg1, %c0_i32_3 : i32
    %10 = arith.extui %9 : i1 to i32
    %c0_i32_4 = arith.constant 0 : i32
    %11 = arith.cmpi ne, %10, %c0_i32_4 : i32
    scf.if %11 {
      %c0_5 = arith.constant 0 : index
      %c0_6 = arith.constant 0 : index
      %12 = vector.load %arg3[%c0_5, %c0_6] : memref<8x1xf32, #tpu.memory_space<vmem>>, vector<8x1xf32>
      %13 = arith.addf %12, %2 : vector<8x1xf32>
      %c0_7 = arith.constant 0 : index
      %c0_8 = arith.constant 0 : index
      %14 = vector.load %arg3[%c0_7, %c0_8] : memref<8x1xf32, #tpu.memory_space<vmem>>, vector<8x1xf32>
      tpu.vector_store %arg3[%c0_7, %c0_8], %13 {strides = array<i32>} : memref<8x1xf32, #tpu.memory_space<vmem>>, vector<8x1xf32>,
      %c0_9 = arith.constant 0 : index
      %c0_10 = arith.constant 0 : index
      %15 = vector.load %arg4[%c0_9, %c0_10] : memref<8x1xf32, #tpu.memory_space<vmem>>, vector<8x1xf32>
      %16 = arith.addf %15, %5 : vector<8x1xf32>
      %c0_11 = arith.constant 0 : index
      %c0_12 = arith.constant 0 : index
      %17 = vector.load %arg4[%c0_11, %c0_12] : memref<8x1xf32, #tpu.memory_space<vmem>>, vector<8x1xf32>
      tpu.vector_store %arg4[%c0_11, %c0_12], %16 {strides = array<i32>} : memref<8x1xf32, #tpu.memory_space<vmem>>, vector<8x1xf32>,
    } else {
    }
    return
  }
  func.func @transform_0(%arg0: i32, %arg1: i32) -> (i32, i32) {
    %c0_i32 = arith.constant 0 : i32
    return %arg0, %arg1 : i32, i32
  }
  func.func @transform_1(%arg0: i32, %arg1: i32) -> (i32, i32) {
    %c0_i32 = arith.constant 0 : i32
    %c0_i32_0 = arith.constant 0 : i32
    return %arg0, %c0_i32 : i32, i32
  }
  func.func @transform_2(%arg0: i32, %arg1: i32) -> (i32, i32) {
    %c0_i32 = arith.constant 0 : i32
    %c0_i32_0 = arith.constant 0 : i32
    return %arg0, %c0_i32 : i32, i32
  }
}

</mosaic_0001>

<llo_original>
// kernel: tpu_custom_call.1
$region0: #{tpu_custom_call.1}
  #allocation0 [shape = 'u32[]', space=smem, size = 0x4, offset = 0x4, fixed_abs, tag = 'smem constant byte address 0x4 - core index']
  #allocation1 [shape = 'u32[144,128]{1,0:T(1,128)}', space=vmem, size = 0x12000, scoped, tag = 'internal scratch']
  %s0 = inlined_call_operand.hbm [shape: f32[8,256], index: 0, kind: input, shape index: {}]
  %s1 = inlined_call_operand.vmem [shape: f32[8,1], index: 1, kind: output, shape index: {0}]
  %s2 = inlined_call_operand.vmem [shape: f32[8,1], index: 2, kind: output, shape index: {1}]
  %3 = xla_tuple %s1, %s2
  %s4 = sld [smem:[#allocation0]]
  $region34: #{tpu_custom_call.1} parent=0
    _
  %s6 = ssub.s32 1, %s4
  %s7 = scalar_select 0, %s6, %s4
  $region1: #{tpu_custom_call.1} parent=0
    #allocation2 [shape = 'u8[8192]{0}', space=vmem, size = 0x2000, scoped, tag = 'input window, operand 0, single buffered']
    #allocation3 [shape = 's32[1]{0}', space=sflag, size = 0x4, scoped, tag = 'scoped memory for tpu_custom_call.1']
    %8 = vsyncpa [#allocation3], 0
    // Predicated region
    $region2: #{tpu_custom_call.1} parent=1 // pred_check
      _
    $region3: #{tpu_custom_call.1} parent=1 // pred_check_branch
      %10 = sbr.rel (0) target = $region5
    $region4: #{tpu_custom_call.1} parent=1 // pred_region
      %s12 = ssub.s32 256, 256
      %13 = vsyncadd [#allocation3], %s12
      %s15 = sshll.u32 [#allocation2], 4
      %s16 = int_to_ptr.vmem [resolvable:$true] %s15
      %18 = dma.hbm_to_vmem [thread:$0]  %s0, 256, %s16, [#allocation3]
    $region5: #{tpu_custom_call.1} parent=1 // pred_fallthru
      _
    // Predicated region
    $region6: #{tpu_custom_call.1} parent=1 // pred_check
      _
    $region7: #{tpu_custom_call.1} parent=1 // pred_check_branch
      %20 = sbr.rel (0) target = $region9
    $region8: #{tpu_custom_call.1} parent=1 // pred_region
      %21 = dma.done [#allocation3], 256
    $region9: #{tpu_custom_call.1} parent=1 // pred_fallthru
      _
    %v22 = vld [vmem:[#allocation2] sm:$0xff]
    %v23 = vld [vmem:[#allocation2 + $0x8] sm:$0xff]
    %v24 = vadd.f32 %v22, %v23
    %25 = vadd.xlane.f32.xlu0 %v24
    %v26 = vpop.xlane.xlu0 %25
    %v27 = vmul.f32 %v22, %v22
    %v28 = vmul.f32 %v23, %v23
    %v29 = vadd.f32 %v27, %v28
    %30 = vadd.xlane.f32.xlu0 %v29
    %v31 = vpop.xlane.xlu0 %30
    %p32 = scmp.eq.s32.totalorder 0, 0
    // Predicated region
    $region10: #{tpu_custom_call.1} parent=1 // pred_check
      %p33 = pneg %p32
    $region11: #{tpu_custom_call.1} parent=1 // pred_check_branch
      %35 = sbr.rel (%p33) target = $region13
    $region12: #{tpu_custom_call.1} parent=1 // pred_region
      %vm36 = vcmask 7168
      %37 = vst.msk [vmem:[%s1] sm:$0xff] %vm36, %v26
      %38 = vst.msk [vmem:[%s2] sm:$0xff] %vm36, %v31
    $region13: #{tpu_custom_call.1} parent=1 // pred_fallthru
      _
    %p39 = scmp.gt.s32.totalorder 0, 0
    // Predicated region
    $region14: #{tpu_custom_call.1} parent=1 // pred_check
      %p40 = pneg %p39
    $region15: #{tpu_custom_call.1} parent=1 // pred_check_branch
      %42 = sbr.rel (%p40) target = $region17
    $region16: #{tpu_custom_call.1} parent=1 // pred_region
      %v43 = vld [vmem:[%s1] sm:$0xff]
      %v44 = vadd.f32 %v43, %v26
      %vm45 = vcmask 7168
      %46 = vst.msk [vmem:[%s1] sm:$0xff] %vm45, %v44
      %v47 = vld [vmem:[%s2] sm:$0xff]
      %v48 = vadd.f32 %v47, %v31
      %49 = vst.msk [vmem:[%s2] sm:$0xff] %vm45, %v48
    $region17: #{tpu_custom_call.1} parent=1 // pred_fallthru
      _
    // Predicated region
    $region18: #{tpu_custom_call.1} parent=1 // pred_check
      _
    $region19: #{tpu_custom_call.1} parent=1 // pred_check_branch
      %51 = sbr.rel (0) target = $region21
    $region20: #{tpu_custom_call.1} parent=1 // pred_region
      _
    $region21: #{tpu_custom_call.1} parent=1 // pred_fallthru
      _
    // Predicated region
    $region22: #{tpu_custom_call.1} parent=1 // pred_check
      _
    $region23: #{tpu_custom_call.1} parent=1 // pred_check_branch
      %53 = sbr.rel (0) target = $region25
    $region24: #{tpu_custom_call.1} parent=1 // pred_region
      _
    $region25: #{tpu_custom_call.1} parent=1 // pred_fallthru
      _
    // Predicated region
    $region26: #{tpu_custom_call.1} parent=1 // pred_check
      _
    $region27: #{tpu_custom_call.1} parent=1 // pred_check_branch
      %55 = sbr.rel (0) target = $region29
    $region28: #{tpu_custom_call.1} parent=1 // pred_region
      _
    $region29: #{tpu_custom_call.1} parent=1 // pred_fallthru
      _
    // Predicated region
    $region30: #{tpu_custom_call.1} parent=1 // pred_check
      _
    $region31: #{tpu_custom_call.1} parent=1 // pred_check_branch
      %57 = sbr.rel (0) target = $region33
    $region32: #{tpu_custom_call.1} parent=1 // pred_region
      _
    $region33: #{tpu_custom_call.1} parent=1 // pred_fallthru
      _
    %58 = vsyncpa [#allocation3], 1

</llo_original>
